<compile_context>
chip_gen: v5e
topology: v5e:2x2
jax: 0.10.0
libtpu: 0.0.40
codegen_flags: <defaults>
</compile_context>

<pallas_src>
import functools

import jax
import jax.numpy as jnp
from jax import lax
from jax.experimental import pallas as pl
from jax.experimental.pallas import tpu as pltpu

_LANE = 128      # last-dim (lane) tiling requirement
_SUBLANE = 8     # second-to-last (sublane) requirement for f32
_NEG_BIG = -1e30  # large negative (not -inf): exp() cleanly underflows to 0


def _round_up(x, m):
    return ((x + m - 1) // m) * m


def _pad2(a, rows, cols):
    """Zero-pad a 2-D array to (rows, cols); no copy if already that shape."""
    if a.shape == (rows, cols):
        return a
    return jnp.zeros((rows, cols), a.dtype).at[:a.shape[0], :a.shape[1]].set(a)


@functools.lru_cache(maxsize=1)
def _vmem_capacity_bytes():
    """Physical per-core VMEM; conservative 64 MiB (v7x) if query fails."""
    try:
        cap = int(getattr(pltpu.get_tpu_info(), "vmem_capacity_bytes", 0))
        if cap > 0:
            return cap
    except Exception:
        pass
    return 64 * 1024 * 1024


def _activation(name, x, valid):
    """Activation on a (rows, cols) f32 tile whose last dim may be zero-padded
    beyond `valid` lanes. ReLU/GeLU are padding-safe; SoLU masks padded lanes
    out of the softmax denominator."""
    if name == "ReLU":
        return jnp.maximum(x, 0.0)
    if name == "GeLU":
        # PyTorch F.gelu default is the exact erf formulation.
        return jax.nn.gelu(x, approximate=False)
    # SoLU: x * softmax(x, axis=-1) restricted to the valid lanes.
    cols = x.shape[-1]
    if valid < cols:
        lane = lax.broadcasted_iota(jnp.int32, x.shape, x.ndim - 1)
        xm = jnp.where(lane < valid, x, _NEG_BIG)   # mask BEFORE exp: no inf
    else:
        xm = x
    m = jnp.max(xm, axis=-1, keepdims=True)            # XLU cross-lane reduce
    e = jnp.exp(xm - m)                                 # EUP; padded lanes -> 0
    denom = jnp.sum(e, axis=-1, keepdims=True)          # XLU cross-lane reduce
    return x * (e * pl.reciprocal(denom, approx=True))  # EUP reciprocal


def _hidden_layer_kernel(x_ref, w1_ref, w2_ref, b_ref, o_ref, acc_ref, *,
                         act_name, n_valid, f_valid):
    k = pl.program_id(1)                      # hidden-dim (reduction) axis

    @pl.when(k == 0)
    def _init():
        acc_ref[...] = jnp.zeros_like(acc_ref)

    x = x_ref[...]                            # (tb, Fp)   native dtype
    w1 = w1_ref[...]                          # (nb, Fp)
    w2 = w2_ref[...]                          # (Fp, nb)

    # h_k = x @ W1_k.T : contract the shared feature (last) dims — no transpose.
    h = lax.dot_general(x, w1, (((1,), (1,)), ((), ())),
                        preferred_element_type=jnp.float32)   # (tb, nb) f32
    h = _activation(act_name, h, n_valid)     # elementwise; SoLU only if nb==n_pad

    # y += h_k @ W2_k.T : contract the shared neuron (last) dims — no transpose.
    acc_ref[...] += lax.dot_general(h.astype(w2.dtype), w2,
                                    (((1,), (1,)), ((), ())),
                                    preferred_element_type=jnp.float32)

    @pl.when(k == pl.num_programs(1) - 1)
    def _finalize():
        y = acc_ref[...] + b_ref[...].astype(jnp.float32)
        y = _activation(act_name, y, f_valid)
        o_ref[...] = y.astype(o_ref.dtype)


def hidden_layer_model_variation(x, W1, W2, b, act_name="ReLU", *,
                                 block_batch=512, neuron_block=None,
                                 mxu_dtype=None):
    """Pallas forward pass. Returns (y, 0) like the PyTorch module."""
    batch, features = x.shape
    neurons = W1.shape[0]
    assert W1.shape == (neurons, features)
    assert W2.shape == (features, neurons)
    assert b.shape == (features,)

    out_dtype = x.dtype
    if mxu_dtype is not None:
        # bf16-native MXU path: half the weight HBM/VMEM traffic, ~3x MXU
        # throughput; f32 accumulate + epilogue, output stays in out_dtype.
        x = x.astype(mxu_dtype)
        W1 = W1.astype(mxu_dtype)
        W2 = W2.astype(mxu_dtype)

    x_isz = jnp.dtype(x.dtype).itemsize
    w_isz = jnp.dtype(W1.dtype).itemsize + jnp.dtype(W2.dtype).itemsize
    b_isz = jnp.dtype(b.dtype).itemsize
    o_isz = jnp.dtype(out_dtype).itemsize

    # Sublane granularity depends on the packed dtype (8 f32, 16 bf16, ...).
    sub = max(_SUBLANE, 32 // x_isz, 32 // o_isz)

    f_pad = _round_up(features, _LANE)
    n_pad = _round_up(neurons, _LANE)
    b_pad = _round_up(batch, sub)

    # ---- VMEM budget (queried: 64 MiB/core v7x, 128 MiB v5e/v6e) ------------
    vmem_cap = _vmem_capacity_bytes()
    budget = int(vmem_cap * 0.70)            # leave compiler headroom
    weight_budget = budget // 2

    # ---- hidden-dim (neuron) tiling ------------------------------------------
    resident_w_bytes = n_pad * f_pad * w_isz          # W1 + W2, single-buffered
    if act_name == "SoLU":
        # SoLU over the hidden layer needs the full neuron row in one tile.
        # TODO(synk): two-pass online softmax to tile SoLU hidden dims.
        nb = n_pad
    elif neuron_block is not None:
        nb = min(n_pad, max(_LANE, _round_up(neuron_block, _LANE)))
    elif resident_w_bytes <= weight_budget:
        nb = n_pad                                    # weights fully VMEM-resident
    else:
        nb = min(n_pad, max(_LANE, (weight_budget // (2 * f_pad * w_isz))
                            // _LANE * _LANE))
    n_pad = _round_up(n_pad, nb)
    nk = n_pad // nb
    wk = 1 if nk == 1 else 2                          # Buffered(1) when resident
    w_tile_bytes = wk * nb * f_pad * w_isz + f_pad * b_isz

    # ---- batch tiling --------------------------------------------------------
    # Per batch row: 2x x-tile + 2x out-tile (double-buffered), f32 accumulator
    # scratch + f32 y temp (f_pad each), f32 h temp (nb).
    per_row = 2 * f_pad * x_isz + 2 * f_pad * o_isz + 2 * f_pad * 4 + nb * 4
    avail = max(budget - w_tile_bytes, sub * per_row)
    tb = min(block_batch, avail // per_row, b_pad)
    tb = max(sub, (tb // sub) * sub)
    if b_pad >= 2 * sub:
        # >= 2 batch steps so the "parallel" axis shards across v7x's 2 TCs.
        tb = min(tb, _round_up(pl.cdiv(b_pad, 2), sub))
    grid_b = pl.cdiv(b_pad, tb)        # ragged last tile OK: rows independent
    grid = (grid_b, nk)

    # ---- padding (skipped when already lane/sublane aligned) ----------------
    x_p = _pad2(x, b_pad, f_pad)
    w1_p = _pad2(W1, n_pad, f_pad)
    w2_p = _pad2(W2, f_pad, n_pad)
    b_p = (b.reshape(1, f_pad) if features == f_pad
           else jnp.zeros((1, f_pad), b.dtype).at[0, :features].set(b))

    # ---- explicit scoped-VMEM limit ------------------------------------------
    est_vmem = w_tile_bytes + tb * per_row
    vmem_limit = int(min(vmem_cap - (4 << 20),
                         max(32 << 20, int(est_vmem * 1.3) + (2 << 20))))

    # Constant-index operands: single-buffer them (no prefetch churn).
    if nk == 1:
        w1_spec = pl.BlockSpec((nb, f_pad), lambda i, k: (0, 0),
                               pipeline_mode=pl.Buffered(1))
        w2_spec = pl.BlockSpec((f_pad, nb), lambda i, k: (0, 0),
                               pipeline_mode=pl.Buffered(1))
    else:
        w1_spec = pl.BlockSpec((nb, f_pad), lambda i, k: (k, 0))
        w2_spec = pl.BlockSpec((f_pad, nb), lambda i, k: (0, k))
    b_spec = pl.BlockSpec((1, f_pad), lambda i, k: (0, 0),
                          pipeline_mode=pl.Buffered(1))

    flops = 4 * b_pad * f_pad * n_pad
    transcendentals = 0 if act_name == "ReLU" else b_pad * (n_pad + f_pad)
    bytes_accessed = int(x_p.size * x_isz + n_pad * f_pad * w_isz
                         + f_pad * b_isz + b_pad * f_pad * o_isz)

    kernel = functools.partial(_hidden_layer_kernel, act_name=act_name,
                               n_valid=neurons, f_valid=features)

    y_p = pl.pallas_call(
        kernel,
        out_shape=jax.ShapeDtypeStruct((b_pad, f_pad), out_dtype),
        grid=grid,
        in_specs=[
            pl.BlockSpec((tb, f_pad), lambda i, k: (i, 0)),    # x: batch tiles
            w1_spec,                                           # W1 (nb, Fp)
            w2_spec,                                           # W2 (Fp, nb)
            b_spec,                                            # bias row
        ],
        out_specs=pl.BlockSpec((tb, f_pad), lambda i, k: (i, 0)),
        scratch_shapes=[pltpu.VMEM((tb, f_pad), jnp.float32)],  # f32 accumulator
        compiler_params=pltpu.CompilerParams(
            dimension_semantics=("parallel", "arbitrary"),
            vmem_limit_bytes=vmem_limit),
        cost_estimate=pl.CostEstimate(flops=flops,
                                      transcendentals=transcendentals,
                                      bytes_accessed=bytes_accessed),
    )(x_p, w1_p, w2_p, b_p)

    return y_p[:batch, :features], 0


def _reference(x, W1, W2, b, act_name="ReLU", precision=None):
    def act(z):
        if act_name == "ReLU":
            return jnp.maximum(z, 0.0)
        if act_name == "GeLU":
            return jax.nn.gelu(z, approximate=False)
        return z * jax.nn.softmax(z, axis=-1)

    h = act(jnp.dot(x, W1.T, precision=precision))
    return act(jnp.dot(h, W2.T, precision=precision) + b)


if __name__ == "__main__":
    key = jax.random.PRNGKey(0)
    k_w1, k_w2, k_b, k_x, k_w1b, k_w2b, k_bb, k_xb = jax.random.split(key, 8)

    # --- toy shapes matching the module defaults ----------------------------
    neurons, features, batch = 6, 3, 8
    W1 = jax.random.normal(k_w1, (neurons, features), dtype=jnp.float32)
    W2 = jax.random.normal(k_w2, (features, neurons), dtype=jnp.float32)
    b = jax.random.normal(k_b, (features,), dtype=jnp.float32)
    x = jax.random.normal(k_x, (batch, features), dtype=jnp.float32)

    # 1) ReLU (module default) — tight tolerance.
    y, aux = hidden_layer_model_variation(x, W1, W2, b, act_name="ReLU")
    y = jax.block_until_ready(y)
    y_ref = _reference(x, W1, W2, b, "ReLU")
    assert y.shape == (batch, features) and aux == 0
    assert jnp.allclose(y, y_ref, atol=1e-5, rtol=1e-5)

    # 2) SoLU — masked softmax + approx reciprocal (looser tolerance).
    y_s, _ = hidden_layer_model_variation(x, W1, W2, b, act_name="SoLU")
    y_s = jax.block_until_ready(y_s)
    assert jnp.allclose(y_s, _reference(x, W1, W2, b, "SoLU"),
                        atol=1e-4, rtol=1e-2)

    # 3) Neuron-tiled reduction path (grid (2, 2), f32 accumulator scratch).
    n2, f2, b2 = 256, 128, 64
    W1b = jax.random.normal(k_w1b, (n2, f2), dtype=jnp.float32) / jnp.sqrt(f2)
    W2b = jax.random.normal(k_w2b, (f2, n2), dtype=jnp.float32) / jnp.sqrt(n2)
    bb = jax.random.normal(k_bb, (f2,), dtype=jnp.float32)
    xb = jax.random.normal(k_xb, (b2, f2), dtype=jnp.float32)
    y_t, _ = hidden_layer_model_variation(xb, W1b, W2b, bb, "ReLU",
                                          neuron_block=128)
    y_f, _ = hidden_layer_model_variation(xb, W1b, W2b, bb, "ReLU")
    y_t, y_f = jax.block_until_ready((y_t, y_f))
    # Split vs fused reduction: identical math up to accumulation order.
    assert jnp.allclose(y_t, y_f, atol=1e-3, rtol=1e-4)
    y_tref = _reference(xb, W1b, W2b, bb, "ReLU",
                        precision=lax.Precision.HIGHEST)
    assert jnp.allclose(y_t, y_tref, atol=5e-2, rtol=5e-3)

    # 4) bf16-MXU smoke test (bf16 operands, f32 accumulate/epilogue).
    y_bf, _ = hidden_layer_model_variation(x, W1, W2, b, "ReLU",
                                           mxu_dtype=jnp.bfloat16)
    y_bf = jax.block_until_ready(y_bf)
    assert y_bf.shape == (batch, features) and y_bf.dtype == x.dtype
    assert bool(jnp.all(jnp.isfinite(y_bf)))
    assert jnp.allclose(y_bf, y_ref, atol=0.5, rtol=0.2)

    print("KERNEL_OK")
</pallas_src>

<mosaic_0001>
module attributes {stable_mosaic.version = 11 : i64} {
  func.func @_hidden_layer_kernel(%arg0: i32, %arg1: i32, %arg2: memref<8x128xf32, #tpu.memory_space<vmem>>, %arg3: memref<128x128xf32, #tpu.memory_space<vmem>>, %arg4: memref<128x128xf32, #tpu.memory_space<vmem>>, %arg5: memref<1x128xf32, #tpu.memory_space<vmem>>, %arg6: memref<8x128xf32, #tpu.memory_space<vmem>>, %arg7: memref<8x128xf32, #tpu.memory_space<vmem>>) attributes {dimension_semantics = [#tpu.dimension_semantics<parallel>, #tpu.dimension_semantics<arbitrary>], iteration_bounds = array<i64: 1, 1>, scalar_prefetch = 0 : i64, scratch_operands = 1 : i64, tpu.core_type = #tpu.core_type<tc>, window_params = [{transform_indices = @transform_0, window_bounds = array<i64: 8, 128>}, {pipeline_mode = #tpu.pipeline_mode<synchronous>, transform_indices = @transform_1, window_bounds = array<i64: 128, 128>}, {pipeline_mode = #tpu.pipeline_mode<synchronous>, transform_indices = @transform_2, window_bounds = array<i64: 128, 128>}, {pipeline_mode = #tpu.pipeline_mode<synchronous>, transform_indices = @transform_3, window_bounds = array<i64: 1, 128>}, {transform_indices = @transform_4, window_bounds = array<i64: 8, 128>}]} {
    %c0_i32 = arith.constant 0 : i32
    %0 = arith.cmpi eq, %arg1, %c0_i32 : i32
    %1 = arith.extui %0 : i1 to i32
    %c0_i32_0 = arith.constant 0 : i32
    %2 = arith.cmpi ne, %1, %c0_i32_0 : i32
    scf.if %2 {
      %cst_14 = arith.constant 0.000000e+00 : f32
      %16 = vector.broadcast %cst_14 : f32 to vector<8x128xf32>
      %c0_15 = arith.constant 0 : index
      %c0_16 = arith.constant 0 : index
      %17 = vector.load %arg7[%c0_15, %c0_16] : memref<8x128xf32, #tpu.memory_space<vmem>>, vector<8x128xf32>
      tpu.vector_store %arg7[%c0_15, %c0_16], %16 {strides = array<i32>} : memref<8x128xf32, #tpu.memory_space<vmem>>, vector<8x128xf32>,
    } else {
    }
    %c0 = arith.constant 0 : index
    %c0_1 = arith.constant 0 : index
    %3 = vector.load %arg2[%c0, %c0_1] : memref<8x128xf32, #tpu.memory_space<vmem>>, vector<8x128xf32>
    %c0_2 = arith.constant 0 : index
    %c0_3 = arith.constant 0 : index
    %4 = vector.load %arg3[%c0_2, %c0_3] : memref<128x128xf32, #tpu.memory_space<vmem>>, vector<128x128xf32>
    %c0_4 = arith.constant 0 : index
    %c0_5 = arith.constant 0 : index
    %5 = vector.load %arg4[%c0_4, %c0_5] : memref<128x128xf32, #tpu.memory_space<vmem>>, vector<128x128xf32>
    %cst = arith.constant dense<0.000000e+00> : vector<8x128xf32>
    %6 = tpu.matmul %3, %4, %cst {dimension_numbers = #tpu.dot_dimension_numbers<[1], [1], [0], [0], [0, 0, 1, 0], [], []>} : vector<8x128xf32>, vector<128x128xf32>, vector<8x128xf32> -> vector<8x128xf32>
    %cst_6 = arith.constant 0.000000e+00 : f32
    %7 = vector.broadcast %cst_6 : f32 to vector<8x128xf32>
    %8 = arith.maximumf %6, %7 : vector<8x128xf32>
    %c0_7 = arith.constant 0 : index
    %c0_8 = arith.constant 0 : index
    %9 = vector.load %arg7[%c0_7, %c0_8] : memref<8x128xf32, #tpu.memory_space<vmem>>, vector<8x128xf32>
    %cst_9 = arith.constant dense<0.000000e+00> : vector<8x128xf32>
    %10 = tpu.matmul %8, %5, %cst_9 {dimension_numbers = #tpu.dot_dimension_numbers<[1], [1], [0], [0], [0, 0, 1, 0], [], []>} : vector<8x128xf32>, vector<128x128xf32>, vector<8x128xf32> -> vector<8x128xf32>
    %11 = arith.addf %9, %10 : vector<8x128xf32>
    %c0_10 = arith.constant 0 : index
    %c0_11 = arith.constant 0 : index
    %12 = vector.load %arg7[%c0_10, %c0_11] : memref<8x128xf32, #tpu.memory_space<vmem>>, vector<8x128xf32>
    tpu.vector_store %arg7[%c0_10, %c0_11], %11 {strides = array<i32>} : memref<8x128xf32, #tpu.memory_space<vmem>>, vector<8x128xf32>,
    %c0_i32_12 = arith.constant 0 : i32
    %13 = arith.cmpi eq, %arg1, %c0_i32_12 : i32
    %14 = arith.extui %13 : i1 to i32
    %c0_i32_13 = arith.constant 0 : i32
    %15 = arith.cmpi ne, %14, %c0_i32_13 : i32
    scf.if %15 {
      %c0_14 = arith.constant 0 : index
      %c0_15 = arith.constant 0 : index
      %16 = vector.load %arg7[%c0_14, %c0_15] : memref<8x128xf32, #tpu.memory_space<vmem>>, vector<8x128xf32>
      %c0_16 = arith.constant 0 : index
      %c0_17 = arith.constant 0 : index
      %17 = vector.load %arg5[%c0_16, %c0_17] : memref<1x128xf32, #tpu.memory_space<vmem>>, vector<1x128xf32>
      %18 = vector.broadcast %17 : vector<1x128xf32> to vector<8x128xf32>
      %19 = arith.addf %16, %18 : vector<8x128xf32>
      %cst_18 = arith.constant 0.000000e+00 : f32
      %20 = vector.broadcast %cst_18 : f32 to vector<8x128xf32>
      %21 = arith.maximumf %19, %20 : vector<8x128xf32>
      %c0_19 = arith.constant 0 : index
      %c0_20 = arith.constant 0 : index
      %22 = vector.load %arg6[%c0_19, %c0_20] : memref<8x128xf32, #tpu.memory_space<vmem>>, vector<8x128xf32>
      tpu.vector_store %arg6[%c0_19, %c0_20], %21 {strides = array<i32>} : memref<8x128xf32, #tpu.memory_space<vmem>>, vector<8x128xf32>,
    } else {
    }
    return
  }
  func.func @transform_0(%arg0: i32, %arg1: i32) -> (i32, i32) {
    %c0_i32 = arith.constant 0 : i32
    %c0_i32_0 = arith.constant 0 : i32
    return %arg0, %c0_i32 : i32, i32
  }
  func.func @transform_1(%arg0: i32, %arg1: i32) -> (i32, i32) {
    %c0_i32 = arith.constant 0 : i32
    %c0_i32_0 = arith.constant 0 : i32
    %c0_i32_1 = arith.constant 0 : i32
    return %c0_i32, %c0_i32_0 : i32, i32
  }
  func.func @transform_2(%arg0: i32, %arg1: i32) -> (i32, i32) {
    %c0_i32 = arith.constant 0 : i32
    %c0_i32_0 = arith.constant 0 : i32
    %c0_i32_1 = arith.constant 0 : i32
    return %c0_i32, %c0_i32_0 : i32, i32
  }
  func.func @transform_3(%arg0: i32, %arg1: i32) -> (i32, i32) {
    %c0_i32 = arith.constant 0 : i32
    %c0_i32_0 = arith.constant 0 : i32
    %c0_i32_1 = arith.constant 0 : i32
    return %c0_i32, %c0_i32_0 : i32, i32
  }
  func.func @transform_4(%arg0: i32, %arg1: i32) -> (i32, i32) {
    %c0_i32 = arith.constant 0 : i32
    %c0_i32_0 = arith.constant 0 : i32
    return %arg0, %c0_i32 : i32, i32
  }
}

</mosaic_0001>

<llo_original>
// kernel: tpu_custom_call.1
$region0: #{tpu_custom_call.1}
  #allocation0 [shape = 'u32[]', space=smem, size = 0x4, offset = 0x4, fixed_abs, tag = 'smem constant byte address 0x4 - core index']
  #allocation1 [shape = 'u32[72,128]{1,0:T(1,128)}', space=vmem, size = 0x9000, scoped, tag = 'internal scratch']
  #allocation2 [shape = 'f32[8,128]{1,0:T(8,128)}', space=vmem, size = 0x1000, scoped, tag = 'scratch operand']
  %s0 = inlined_call_operand.hbm [shape: f32[8,128], index: 0, kind: input, shape index: {}]
  %s1 = inlined_call_operand.hbm [shape: f32[128,128], index: 1, kind: input, shape index: {}]
  %s2 = inlined_call_operand.hbm [shape: f32[128,128], index: 2, kind: input, shape index: {}]
  %s3 = inlined_call_operand.vmem [shape: f32[1,128], index: 3, kind: input, shape index: {}]
  %s4 = inlined_call_operand.hbm [shape: f32[8,128], index: 4, kind: output, shape index: {}]
  %s5 = sld [smem:[#allocation0]]
  $region46: #{tpu_custom_call.1} parent=0
    _
  %s7 = ssub.s32 1, %s5
  %s8 = scalar_select 0, %s7, %s5
  $region1: #{tpu_custom_call.1} parent=0
    #allocation3 [shape = 'u8[4096]{0}', space=vmem, size = 0x1000, scoped, tag = 'input window, operand 0, single buffered']
    #allocation4 [shape = 's32[1]{0}', space=sflag, size = 0x4, scoped, tag = 'scoped memory for tpu_custom_call.1']
    #allocation5 [shape = 's32[1]{0}', space=sflag, size = 0x4, scoped, tag = 'scoped memory for tpu_custom_call.1']
    #allocation6 [shape = 'u8[65536]{0}', space=vmem, size = 0x10000, scoped, tag = 'input window, operand 1, single buffered']
    #allocation7 [shape = 's32[1]{0}', space=sflag, size = 0x4, scoped, tag = 'scoped memory for tpu_custom_call.1']
    #allocation8 [shape = 'u8[65536]{0}', space=vmem, size = 0x10000, scoped, tag = 'input window, operand 2, single buffered']
    #allocation9 [shape = 'u8[4096]{0}', space=vmem, size = 0x1000, scoped, tag = 'output window, operand 0, single buffered']
    %9 = vsyncpa [#allocation4], 0
    %10 = vsyncpa [#allocation7], 0
    %11 = vsyncpa [#allocation5], 0
    // Predicated region
    $region2: #{tpu_custom_call.1} parent=1 // pred_check
      _
    $region3: #{tpu_custom_call.1} parent=1 // pred_check_branch
      %13 = sbr.rel (0) target = $region5
    $region4: #{tpu_custom_call.1} parent=1 // pred_region
      %15 = vsyncadd [#allocation4], 0
      %s17 = sshll.u32 %s0, 4
      %s18 = int_to_ptr.hbm [resolvable:$true] %s17
      %s19 = sshll.u32 [#allocation3], 4
      %s20 = int_to_ptr.vmem [resolvable:$true] %s19
      %22 = dma.hbm_to_vmem [thread:$0]  %s18, 128, %s20, [#allocation4]
    $region5: #{tpu_custom_call.1} parent=1 // pred_fallthru
      _
    // Predicated region
    $region6: #{tpu_custom_call.1} parent=1 // pred_check
      _
    $region7: #{tpu_custom_call.1} parent=1 // pred_check_branch
      %24 = sbr.rel (0) target = $region9
    $region8: #{tpu_custom_call.1} parent=1 // pred_region
      %26 = vsyncadd [#allocation7], 0
      %s27 = sshll.u32 %s1, 4
      %s28 = int_to_ptr.hbm [resolvable:$true] %s27
      %s29 = sshll.u32 [#allocation6], 4
      %s30 = int_to_ptr.vmem [resolvable:$true] %s29
      %35 = dma.hbm_to_vmem [thread:$0]  %s28, 2048, %s30, [#allocation7], 128, 128, 8
    $region9: #{tpu_custom_call.1} parent=1 // pred_fallthru
      _
    // Predicated region
    $region10: #{tpu_custom_call.1} parent=1 // pred_check
      _
    $region11: #{tpu_custom_call.1} parent=1 // pred_check_branch
      %37 = sbr.rel (0) target = $region13
    $region12: #{tpu_custom_call.1} parent=1 // pred_region
      %39 = vsyncadd [#allocation7], 0
      %s40 = sshll.u32 %s2, 4
      %s41 = int_to_ptr.hbm [resolvable:$true] %s40
      %s42 = sshll.u32 [#allocation8], 4
      %s43 = int_to_ptr.vmem [resolvable:$true] %s42
      %48 = dma.hbm_to_vmem [thread:$0]  %s41, 2048, %s43, [#allocation7], 128, 128, 8
    $region13: #{tpu_custom_call.1} parent=1 // pred_fallthru
      _
    // Predicated region
    $region14: #{tpu_custom_call.1} parent=1 // pred_check
      _
    $region15: #{tpu_custom_call.1} parent=1 // pred_check_branch
      %50 = sbr.rel (0) target = $region17
    $region16: #{tpu_custom_call.1} parent=1 // pred_region
      _
    $region17: #{tpu_custom_call.1} parent=1 // pred_fallthru
      _
    // Predicated region
    $region18: #{tpu_custom_call.1} parent=1 // pred_check
      _
    $region19: #{tpu_custom_call.1} parent=1 // pred_check_branch
      %52 = sbr.rel (0) target = $region21
    $region20: #{tpu_custom_call.1} parent=1 // pred_region
      %54 = dma.done [#allocation4], 128
    $region21: #{tpu_custom_call.1} parent=1 // pred_fallthru
      _
    // Predicated region
    $region22: #{tpu_custom_call.1} parent=1 // pred_check
      _
    $region23: #{tpu_custom_call.1} parent=1 // pred_check_branch
      %56 = sbr.rel (0) target = $region25
    $region24: #{tpu_custom_call.1} parent=1 // pred_region
      %58 = dma.done [#allocation7], 2048
    $region25: #{tpu_custom_call.1} parent=1 // pred_fallthru
      _
    // Predicated region
    $region26: #{tpu_custom_call.1} parent=1 // pred_check
      _
    $region27: #{tpu_custom_call.1} parent=1 // pred_check_branch
      %60 = sbr.rel (0) target = $region29
    $region28: #{tpu_custom_call.1} parent=1 // pred_region
      %62 = dma.done [#allocation7], 2048
    $region29: #{tpu_custom_call.1} parent=1 // pred_fallthru
      _
    %p63 = scmp.eq.s32.totalorder 0, 0
    // Predicated region
    $region30: #{tpu_custom_call.1} parent=1 // pred_check
      %p64 = pneg %p63
    $region31: #{tpu_custom_call.1} parent=1 // pred_check_branch
      %66 = sbr.rel (%p64) target = $region33
    $region32: #{tpu_custom_call.1} parent=1 // pred_region
      %67 = vst [vmem:[#allocation2] sm:$0xff] 0.0
    $region33: #{tpu_custom_call.1} parent=1 // pred_fallthru
      _
    %v68 = vld [vmem:[#allocation3] sm:$0xff]
    %v69 = vld [vmem:[#allocation6] sm:$0xff]
    %v70 = vld [vmem:[#allocation6 + $0x8] sm:$0xff]
    %v71 = vld [vmem:[#allocation6 + $0x10] sm:$0xff]
    %v72 = vld [vmem:[#allocation6 + $0x18] sm:$0xff]
    %v73 = vld [vmem:[#allocation6 + $0x20] sm:$0xff]
    %v74 = vld [vmem:[#allocation6 + $0x28] sm:$0xff]
    %v75 = vld [vmem:[#allocation6 + $0x30] sm:$0xff]
    %v76 = vld [vmem:[#allocation6 + $0x38] sm:$0xff]
    %v77 = vld [vmem:[#allocation6 + $0x40] sm:$0xff]
    %v78 = vld [vmem:[#allocation6 + $0x48] sm:$0xff]
    %v79 = vld [vmem:[#allocation6 + $0x50] sm:$0xff]
    %v80 = vld [vmem:[#allocation6 + $0x58] sm:$0xff]
    %v81 = vld [vmem:[#allocation6 + $0x60] sm:$0xff]
    %v82 = vld [vmem:[#allocation6 + $0x68] sm:$0xff]
    %v83 = vld [vmem:[#allocation6 + $0x70] sm:$0xff]
    %v84 = vld [vmem:[#allocation6 + $0x78] sm:$0xff]
    %v85 = vld [vmem:[#allocation8] sm:$0xff]
    %v86 = vld [vmem:[#allocation8 + $0x8] sm:$0xff]
    %v87 = vld [vmem:[#allocation8 + $0x10] sm:$0xff]
    %v88 = vld [vmem:[#allocation8 + $0x18] sm:$0xff]
    %v89 = vld [vmem:[#allocation8 + $0x20] sm:$0xff]
    %v90 = vld [vmem:[#allocation8 + $0x28] sm:$0xff]
    %v91 = vld [vmem:[#allocation8 + $0x30] sm:$0xff]
    %v92 = vld [vmem:[#allocation8 + $0x38] sm:$0xff]
    %v93 = vld [vmem:[#allocation8 + $0x40] sm:$0xff]
    %v94 = vld [vmem:[#allocation8 + $0x48] sm:$0xff]
    %v95 = vld [vmem:[#allocation8 + $0x50] sm:$0xff]
    %v96 = vld [vmem:[#allocation8 + $0x58] sm:$0xff]
    %v97 = vld [vmem:[#allocation8 + $0x60] sm:$0xff]
    %v98 = vld [vmem:[#allocation8 + $0x68] sm:$0xff]
    %v99 = vld [vmem:[#allocation8 + $0x70] sm:$0xff]
    %v100 = vld [vmem:[#allocation8 + $0x78] sm:$0xff]
    %101 = vmatpush.xpose.msra.mxu0 %v84
    %102 = vmatpush.xpose.msra.mxu0 %v83
    %103 = vmatpush.xpose.msra.mxu0 %v82
    %104 = vmatpush.xpose.msra.mxu0 %v81
    %105 = vmatpush.xpose.msra.mxu0 %v80
    %106 = vmatpush.xpose.msra.mxu0 %v79
    %107 = vmatpush.xpose.msra.mxu0 %v78
    %108 = vmatpush.xpose.msra.mxu0 %v77
    %109 = vmatpush.xpose.msra.mxu0 %v76
    %110 = vmatpush.xpose.msra.mxu0 %v75
    %111 = vmatpush.xpose.msra.mxu0 %v74
    %112 = vmatpush.xpose.msra.mxu0 %v73
    %113 = vmatpush.xpose.msra.mxu0 %v72
    %114 = vmatpush.xpose.msra.mxu0 %v71
    %115 = vmatpush.xpose.msra.mxu0 %v70
    %116 = vmatpush.xpose.msra.mxu0 %v69
    %117 = vmatmul.f32.gmra.mxu0 %v68
    %v118 = vpop.f32.mrf.mxu0
    %v119 = vadd.f32 0.0, %v118
    %120 = vdwg.mxu0
    %v121 = vmax.f32 %v119, 0.0
    %v122 = vld [vmem:[#allocation2] sm:$0xff]
    %123 = vmatpush.xpose.msra.mxu0 %v100
    %124 = vmatpush.xpose.msra.mxu0 %v99
    %125 = vmatpush.xpose.msra.mxu0 %v98
    %126 = vmatpush.xpose.msra.mxu0 %v97
    %127 = vmatpush.xpose.msra.mxu0 %v96
    %128 = vmatpush.xpose.msra.mxu0 %v95
    %129 = vmatpush.xpose.msra.mxu0 %v94
    %130 = vmatpush.xpose.msra.mxu0 %v93
    %131 = vmatpush.xpose.msra.mxu0 %v92
    %132 = vmatpush.xpose.msra.mxu0 %v91
    %133 = vmatpush.xpose.msra.mxu0 %v90
    %134 = vmatpush.xpose.msra.mxu0 %v89
    %135 = vmatpush.xpose.msra.mxu0 %v88
    %136 = vmatpush.xpose.msra.mxu0 %v87
    %137 = vmatpush.xpose.msra.mxu0 %v86
    %138 = vmatpush.xpose.msra.mxu0 %v85
    %139 = vmatmul.f32.gmra.mxu0 %v121
    %v140 = vpop.f32.mrf.mxu0
    %v141 = vadd.f32 0.0, %v140
    %142 = vdwg.mxu0
    %v143 = vadd.f32 %v122, %v141
    %144 = vst [vmem:[#allocation2] sm:$0xff] %v143
    // Predicated region
    $region34: #{tpu_custom_call.1} parent=1 // pred_check
      %p145 = pneg %p63
    $region35: #{tpu_custom_call.1} parent=1 // pred_check_branch
      %147 = sbr.rel (%p145) target = $region37
    $region36: #{tpu_custom_call.1} parent=1 // pred_region
      %v148 = vld [vmem:[#allocation2] sm:$0xff]
      %v149 = vld [vmem:[%s3] sm:$0x1]
      %v151 = vperm.slane %v149, 0
      %v153 = vadd.f32 %v148, %v151
      %v154 = vmax.f32 %v153, 0.0
      %155 = vst [vmem:[#allocation9] sm:$0xff] %v154
    $region37: #{tpu_custom_call.1} parent=1 // pred_fallthru
      _
    // Predicated region
    $region38: #{tpu_custom_call.1} parent=1 // pred_check
      _
    $region39: #{tpu_custom_call.1} parent=1 // pred_check_branch
      %157 = sbr.rel (0) target = $region41
    $region40: #{tpu_custom_call.1} parent=1 // pred_region
      %159 = vsyncadd [#allocation5], 0
      %s161 = sshll.u32 [#allocation9], 4
      %s162 = int_to_ptr.vmem [resolvable:$true] %s161
      %s163 = sshll.u32 %s4, 4
      %s164 = int_to_ptr.hbm [resolvable:$true] %s163
      %166 = dma.vmem_to_hbm [thread:$0]  %s162, 128, %s164, [#allocation5]
    $region41: #{tpu_custom_call.1} parent=1 // pred_fallthru
      _
    // Predicated region
    $region42: #{tpu_custom_call.1} parent=1 // pred_check
      _
    $region43: #{tpu_custom_call.1} parent=1 // pred_check_branch
      %168 = sbr.rel (0) target = $region45
    $region44: #{tpu_custom_call.1} parent=1 // pred_region
      %170 = dma.done [#allocation5], 128
    $region45: #{tpu_custom_call.1} parent=1 // pred_fallthru
      _
    %171 = vsyncpa [#allocation4], 1
    %172 = vsyncpa [#allocation7], 1
    %173 = vsyncpa [#allocation5], 1

</llo_original>
